<compile_context>
chip_gen: v7x
topology: tpu7x:2x2x1
jax: 0.10.0
libtpu: 0.0.40
codegen_flags: <defaults>
</compile_context>

<pallas_src>
import functools

import jax
import jax.numpy as jnp
from jax.experimental import pallas as pl
from jax.experimental.pallas import tpu as pltpu


# ---------------------------------------------------------------------------
# Fused conv + BN (+ residual) (+ ReLU) Pallas kernel
# ---------------------------------------------------------------------------
def _fused_conv_kernel(*refs, taps, out_hw, relu, has_residual):
    """One image per grid step.

    refs = (x_ref, w_ref, scale_ref, shift_ref, [res_ref], o_ref)
      x_ref : (1, P, Hph, Wph, Cin)   phase-decomposed padded input (bf16)
      w_ref : (T, Cin, Cout)          one (Cin, Cout) slice per conv tap (bf16)
      scale_ref, shift_ref : (1, Cout) folded BatchNorm affine (f32)
      res_ref (optional) : (1, Ho*Wo, Cout) residual, added before ReLU (bf16)
      o_ref : (1, Ho*Wo, Cout)        output (bf16)
    """
    if has_residual:
        x_ref, w_ref, scale_ref, shift_ref, res_ref, o_ref = refs
    else:
        x_ref, w_ref, scale_ref, shift_ref, o_ref = refs
    ho, wo = out_hw
    cin = x_ref.shape[-1]

    # In-kernel im2col: accumulate each tap's (Ho*Wo, Cin) x (Cin, Cout)
    # matmul in f32 -- the 9x patch tensor never touches HBM.
    acc = None
    for t, (p, qi, qj) in enumerate(taps):
        tap = x_ref[0, p, qi:qi + ho, qj:qj + wo, :].reshape(ho * wo, cin)
        contrib = jnp.dot(tap, w_ref[t], preferred_element_type=jnp.float32)
        acc = contrib if acc is None else acc + contrib

    y = acc * scale_ref[...] + shift_ref[...]          # fused BatchNorm affine
    if has_residual:
        y = y + res_ref[0].astype(jnp.float32)         # fused residual add
    if relu:
        y = jnp.maximum(y, 0.0)
    o_ref[0] = y.astype(o_ref.dtype)


def fused_conv_bn(x_phases, w, scale, shift, out_hw, *, taps, relu,
                  residual=None):
    """Conv (expressed as `taps` on a phase-decomposed padded map) + BN affine
    + optional residual + optional ReLU.  Returns NHWC bf16."""
    n, p, hph, wph, cin = x_phases.shape
    t, _, cout = w.shape
    ho, wo = out_hw
    m = ho * wo

    kernel = functools.partial(_fused_conv_kernel, taps=taps, out_hw=out_hw,
                               relu=relu, has_residual=residual is not None)
    in_specs = [
        pl.BlockSpec((1, p, hph, wph, cin), lambda i: (i, 0, 0, 0, 0)),
        pl.BlockSpec((t, cin, cout), lambda i: (0, 0, 0)),
        pl.BlockSpec((1, cout), lambda i: (0, 0)),
        pl.BlockSpec((1, cout), lambda i: (0, 0)),
    ]
    args = [x_phases, w, scale, shift]
    if residual is not None:
        in_specs.append(pl.BlockSpec((1, m, cout), lambda i: (i, 0, 0)))
        args.append(residual.reshape(n, m, cout))

    in_bytes = sum(int(a.size) * a.dtype.itemsize for a in args)
    out_bytes = n * m * cout * 2
    flops = 2 * n * m * t * cin * cout

    out = pl.pallas_call(
        kernel,
        out_shape=jax.ShapeDtypeStruct((n, m, cout), jnp.bfloat16),
        grid=(n,),
        in_specs=in_specs,
        out_specs=pl.BlockSpec((1, m, cout), lambda i: (i, 0, 0)),
        compiler_params=pltpu.CompilerParams(
            dimension_semantics=("parallel",),
            vmem_limit_bytes=32 * 1024 * 1024),
        cost_estimate=pl.CostEstimate(flops=flops, transcendentals=0,
                                      bytes_accessed=in_bytes + out_bytes),
    )(*args)
    return out.reshape(n, ho, wo, cout)


# ---------------------------------------------------------------------------
# Plain-JAX glue (1x-traffic layout prep, no patch duplication)
# ---------------------------------------------------------------------------
def _phase_stack(x, stride):
    """Pad H/W by 1 and, for stride 2, split into the 4 stride-phase maps.

    Output: (N, stride*stride, Hph, Wph, C).  Total bytes == 1x the padded
    input -- this replaces the old 9x im2col materialization."""
    assert stride in (1, 2)
    n, h, w, c = x.shape
    xp = jnp.pad(x, ((0, 0), (1, 1), (1, 1), (0, 0)))
    if stride == 1:
        return xp[:, None]                               # (N, 1, H+2, W+2, C)
    hp, wp = h + 2, w + 2
    hp2, wp2 = hp + hp % 2, wp + wp % 2
    xp = jnp.pad(xp, ((0, 0), (0, hp2 - hp), (0, wp2 - wp), (0, 0)))
    ph = xp.reshape(n, hp2 // 2, 2, wp2 // 2, 2, c)
    ph = ph.transpose(0, 2, 4, 1, 3, 5)                  # (N, pi, pj, r, c, C)
    return ph.reshape(n, 4, hp2 // 2, wp2 // 2, c)


def _taps_3x3(stride):
    # Tap (di, dj) of a pad=1 3x3 conv reads padded position
    # (s*ho + di, s*wo + dj) == phase (di%s, dj%s) at (ho + di//s, wo + dj//s).
    return tuple(((di % stride) * stride + (dj % stride),
                  di // stride, dj // stride)
                 for di in range(3) for dj in range(3))


def _taps_1x1(stride):
    # 1x1, pad=0 conv evaluated on the SAME pad=1 phase stack: it reads padded
    # position (s*ho + 1, s*wo + 1).
    return (((1 % stride) * stride + (1 % stride), 1 // stride, 1 // stride),)


# ---------------------------------------------------------------------------
# Parameter construction (mirrors the module's deterministic init)
# ---------------------------------------------------------------------------
def _fold_bn(c, eps=1e-5):
    # BatchNorm2d at init: gamma=1, beta=0, running_mean=0, running_var=1.
    gamma = jnp.ones((c,), jnp.float32)
    beta = jnp.zeros((c,), jnp.float32)
    mean = jnp.zeros((c,), jnp.float32)
    var = jnp.ones((c,), jnp.float32)
    scale = gamma / jnp.sqrt(var + eps)
    shift = beta - mean * scale
    return scale.reshape(1, c), shift.reshape(1, c)


def _kaiming_conv(key, k, cin, cout):
    # nn.init.kaiming_normal_(mode='fan_out', nonlinearity='relu')
    fan_out = cout * k * k
    std = (2.0 / fan_out) ** 0.5
    w = jax.random.normal(key, (k, k, cin, cout), jnp.float32) * std
    return w.reshape(k * k, cin, cout).astype(jnp.bfloat16)   # (T, Cin, Cout)


def make_basic_block(key, in_channel, channel, stride=1):
    k1, k2, k3 = jax.random.split(key, 3)
    s1, b1 = _fold_bn(channel)
    s2, b2 = _fold_bn(channel)
    params = {
        "stride": stride,
        "w1": _kaiming_conv(k1, 3, in_channel, channel),
        "bn1_scale": s1, "bn1_shift": b1,
        "w2": _kaiming_conv(k2, 3, channel, channel),
        "bn2_scale": s2, "bn2_shift": b2,
        "downsample": None,
    }
    if stride != 1 or in_channel != channel:
        # Standard ResNet downsample: 1x1 conv (stride) + BN.
        sd, bd = _fold_bn(channel)
        params["downsample"] = {"w": _kaiming_conv(k3, 1, in_channel, channel),
                                "scale": sd, "shift": bd}
    return params


# ---------------------------------------------------------------------------
# BasicBlock forward (NHWC bf16 -> NHWC bf16)
# ---------------------------------------------------------------------------
def basic_block_forward(params, x):
    n, h, w, _ = x.shape
    s = params["stride"]
    ho, wo = (h - 1) // s + 1, (w - 1) // s + 1
    xph = _phase_stack(x, s)            # shared by conv1 AND the downsample

    if params["downsample"] is not None:
        d = params["downsample"]
        identity = fused_conv_bn(xph, d["w"], d["scale"], d["shift"],
                                 (ho, wo), taps=_taps_1x1(s), relu=False)
    else:
        identity = x

    h1 = fused_conv_bn(xph, params["w1"], params["bn1_scale"],
                       params["bn1_shift"], (ho, wo),
                       taps=_taps_3x3(s), relu=True)
    # conv2 + bn2 + (+= identity) + relu, all in one kernel epilogue.
    out = fused_conv_bn(_phase_stack(h1, 1), params["w2"], params["bn2_scale"],
                        params["bn2_shift"], (ho, wo),
                        taps=_taps_3x3(1), relu=True, residual=identity)
    return out


# ---------------------------------------------------------------------------
if __name__ == "__main__":
    key = jax.random.PRNGKey(0)
    k_in, k_a, k_b = jax.random.split(key, 3)

    batch, in_ch, size = 2, 32, 16
    x_nchw = jax.random.normal(k_in, (batch, in_ch, size, size), jnp.float32)

    # Block A: stride-2 + channel change -> exercises the downsample branch.
    # Block B: stride-1, same channels  -> exercises the identity branch.
    block_a = make_basic_block(k_a, in_channel=in_ch, channel=64, stride=2)
    block_b = make_basic_block(k_b, in_channel=64, channel=64, stride=1)

    x = jnp.transpose(x_nchw, (0, 2, 3, 1)).astype(jnp.bfloat16)  # NCHW->NHWC
    y = basic_block_forward(block_a, x)
    y = basic_block_forward(block_b, y)
    out = jnp.transpose(y, (0, 3, 1, 2)).astype(jnp.float32)      # NHWC->NCHW
    out = jax.block_until_ready(out)

    assert out.shape == (batch, 64, size // 2, size // 2)
    assert bool(jnp.all(jnp.isfinite(out)))
    print("KERNEL_OK")
</pallas_src>

<mosaic_0001>
module attributes {stable_mosaic.version = 11 : i64} {
  func.func @_fused_conv_kernel(%arg0: i32, %arg1: memref<1x4x9x9x32xbf16, #tpu.memory_space<vmem>>, %arg2: memref<1x32x64xbf16, #tpu.memory_space<vmem>>, %arg3: memref<1x64xf32, #tpu.memory_space<vmem>>, %arg4: memref<1x64xf32, #tpu.memory_space<vmem>>, %arg5: memref<1x64x64xbf16, #tpu.memory_space<vmem>>) attributes {dimension_semantics = [#tpu.dimension_semantics<parallel>], iteration_bounds = array<i64: 2>, scalar_prefetch = 0 : i64, scratch_operands = 0 : i64, tpu.core_type = #tpu.core_type<tc>, window_params = [{transform_indices = @transform_0, window_bounds = array<i64: 1, 4, 9, 9, 32>}, {pipeline_mode = #tpu.pipeline_mode<synchronous>, transform_indices = @transform_1, window_bounds = array<i64: 1, 32, 64>}, {pipeline_mode = #tpu.pipeline_mode<synchronous>, transform_indices = @transform_2, window_bounds = array<i64: 1, 64>}, {pipeline_mode = #tpu.pipeline_mode<synchronous>, transform_indices = @transform_3, window_bounds = array<i64: 1, 64>}, {transform_indices = @transform_4, window_bounds = array<i64: 1, 64, 64>}]} {
    %c0 = arith.constant 0 : index
    %c3 = arith.constant 3 : index
    %c0_0 = arith.constant 0 : index
    %c0_1 = arith.constant 0 : index
    %c0_2 = arith.constant 0 : index
    %0 = vector.load %arg1[%c0, %c3, %c0_0, %c0_1, %c0_2] : memref<1x4x9x9x32xbf16, #tpu.memory_space<vmem>>, vector<1x1x8x8x32xbf16>
    %1 = vector.shape_cast %0 : vector<1x1x8x8x32xbf16> to vector<8x8x32xbf16>
    %2 = vector.shape_cast %1 : vector<8x8x32xbf16> to vector<64x32xbf16>
    %c0_3 = arith.constant 0 : index
    %c0_4 = arith.constant 0 : index
    %c0_5 = arith.constant 0 : index
    %3 = vector.load %arg2[%c0_3, %c0_4, %c0_5] : memref<1x32x64xbf16, #tpu.memory_space<vmem>>, vector<1x32x64xbf16>
    %4 = vector.shape_cast %3 : vector<1x32x64xbf16> to vector<32x64xbf16>
    %cst = arith.constant dense<0.000000e+00> : vector<64x64xf32>
    %5 = tpu.matmul %2, %4, %cst {dimension_numbers = #tpu.dot_dimension_numbers<[1], [0], [0], [1], [0, 0, 1, 1], [], []>} : vector<64x32xbf16>, vector<32x64xbf16>, vector<64x64xf32> -> vector<64x64xf32>
    %c0_6 = arith.constant 0 : index
    %c0_7 = arith.constant 0 : index
    %6 = vector.load %arg3[%c0_6, %c0_7] : memref<1x64xf32, #tpu.memory_space<vmem>>, vector<1x64xf32>
    %7 = vector.broadcast %6 : vector<1x64xf32> to vector<64x64xf32>
    %8 = arith.mulf %5, %7 : vector<64x64xf32>
    %c0_8 = arith.constant 0 : index
    %c0_9 = arith.constant 0 : index
    %9 = vector.load %arg4[%c0_8, %c0_9] : memref<1x64xf32, #tpu.memory_space<vmem>>, vector<1x64xf32>
    %10 = vector.broadcast %9 : vector<1x64xf32> to vector<64x64xf32>
    %11 = arith.addf %8, %10 : vector<64x64xf32>
    %12 = arith.truncf %11 : vector<64x64xf32> to vector<64x64xbf16>
    %c0_10 = arith.constant 0 : index
    %c0_11 = arith.constant 0 : index
    %c0_12 = arith.constant 0 : index
    %13 = vector.load %arg5[%c0_10, %c0_11, %c0_12] : memref<1x64x64xbf16, #tpu.memory_space<vmem>>, vector<1x64x64xbf16>
    %14 = vector.shape_cast %13 : vector<1x64x64xbf16> to vector<64x64xbf16>
    %15 = vector.shape_cast %12 : vector<64x64xbf16> to vector<1x64x64xbf16>
    tpu.vector_store %arg5[%c0_10, %c0_11, %c0_12], %15 {strides = array<i32>} : memref<1x64x64xbf16, #tpu.memory_space<vmem>>, vector<1x64x64xbf16>,
    return
  }
  func.func @transform_0(%arg0: i32) -> (i32, i32, i32, i32, i32) {
    %c0_i32 = arith.constant 0 : i32
    %c0_i32_0 = arith.constant 0 : i32
    %c0_i32_1 = arith.constant 0 : i32
    %c0_i32_2 = arith.constant 0 : i32
    %c0_i32_3 = arith.constant 0 : i32
    return %arg0, %c0_i32, %c0_i32_0, %c0_i32_1, %c0_i32_2 : i32, i32, i32, i32, i32
  }
  func.func @transform_1(%arg0: i32) -> (i32, i32, i32) {
    %c0_i32 = arith.constant 0 : i32
    %c0_i32_0 = arith.constant 0 : i32
    %c0_i32_1 = arith.constant 0 : i32
    %c0_i32_2 = arith.constant 0 : i32
    return %c0_i32, %c0_i32_0, %c0_i32_1 : i32, i32, i32
  }
  func.func @transform_2(%arg0: i32) -> (i32, i32) {
    %c0_i32 = arith.constant 0 : i32
    %c0_i32_0 = arith.constant 0 : i32
    %c0_i32_1 = arith.constant 0 : i32
    return %c0_i32, %c0_i32_0 : i32, i32
  }
  func.func @transform_3(%arg0: i32) -> (i32, i32) {
    %c0_i32 = arith.constant 0 : i32
    %c0_i32_0 = arith.constant 0 : i32
    %c0_i32_1 = arith.constant 0 : i32
    return %c0_i32, %c0_i32_0 : i32, i32
  }
  func.func @transform_4(%arg0: i32) -> (i32, i32, i32) {
    %c0_i32 = arith.constant 0 : i32
    %c0_i32_0 = arith.constant 0 : i32
    %c0_i32_1 = arith.constant 0 : i32
    return %arg0, %c0_i32, %c0_i32_0 : i32, i32, i32
  }
}

</mosaic_0001>

<llo_original>
// kernel: tpu_custom_call.1
$region0: #{tpu_custom_call.1}
  #allocation0 [shape = 'u32[]', space=smem, size = 0x4, offset = 0x4, fixed_abs, tag = 'smem constant byte address 0x4 - core index']
  #allocation1 [shape = 'u32[144,128]{1,0:T(1,128)}', space=vmem, size = 0x12000, scoped, tag = 'internal scratch']
  %s0 = inlined_call_operand.vmem [shape: bf16[2,4,9,9,32], index: 0, kind: input, shape index: {}]
  %s1 = inlined_call_operand.vmem [shape: bf16[1,32,64], index: 1, kind: input, shape index: {}]
  %s2 = inlined_call_operand.vmem [shape: f32[1,64], index: 2, kind: input, shape index: {}]
  %s3 = inlined_call_operand.vmem [shape: f32[1,64], index: 3, kind: input, shape index: {}]
  %s4 = inlined_call_operand.hbm [shape: bf16[2,64,64], index: 4, kind: output, shape index: {}]
  %s5 = sld [smem:[#allocation0]]
  $region49: #{tpu_custom_call.1} parent=0
    _
  %s7 = ssub.s32 1, %s5
  %s8 = scalar_select 0, %s7, %s5
  $region1: #{tpu_custom_call.1} parent=0
    #allocation2 [shape = 'u8[32768]{0}', space=vmem, size = 0x8000, scoped, tag = 'output window, operand 0']
    #allocation3 [shape = 's32[2]{0}', space=sflag, size = 0x8, scoped, tag = 'scoped memory for tpu_custom_call.1']
    %9 = vsyncpa [#allocation3], 0
    %s10 = scalar_lea.sflag [#allocation3], 1
    %11 = vsyncpa %s10, 0
    loop: start=0, step=1, limit=4
    $region2: #{tpu_custom_call.1} parent=1 // loop_pre_header
      _
    $region3: #{tpu_custom_call.1} parent=1 // loop_header
      %s13 = sphi 0, %s17
      %p14 = scmp.ge.s32.totalorder %s13, 4
      %s23 = sphi 0, %s25
      %s26 = sphi 0, %s23
      %s27 = sphi 0, %s26
      %s43 = sphi 0, %s27
      %s47 = sphi 0, %s47
      %s49 = sphi 0, %s47
      %s50 = sphi 0, %s49
      %s64 = sphi 0, %s50
      %s68 = sphi 0, %s68
      %s70 = sphi 0, %s68
      %s71 = sphi 0, %s70
      %s85 = sphi 0, %s71
      %s89 = sphi 0, %s89
      %s91 = sphi 0, %s89
      %s92 = sphi 0, %s91
      %s106 = sphi 0, %s92
      %s112 = sphi 0, %s114
      %s115 = sphi 0, %s112
      %s116 = sphi 0, %s115
      %s132 = sphi 0, %s116
    $region4: #{tpu_custom_call.1} parent=1 // loop_header_branch
      %16 = sbr.rel (%p14) target = $region8
    $region5: #{tpu_custom_call.1} parent=1 // loop_body
      %s18 = ssub.s32 %s13, 1
      %s19 = ssub.s32 %s13, 2
      %s20 = sadd.s32 %s13, 1
      %s21 = ssub.s32 %s13, %s20
      %p22 = scmp.eq.s32.totalorder %s21, 0
      %s24 = sadd.s32 %s23, 1
      %s25 = scalar_select %p22, %s23, %s24
      %p28 = pneg %p22
      %p29 = scmp.eq.s32.totalorder %s13, 1
      %p30 = por %p28, %p29
      %p31 = scmp.ne.s32.totalorder %s23, %s26
      %p32 = scmp.eq.s32.totalorder %s13, 0
      %p33 = por %p31, %p32
      %p34 = scmp.ne.s32.totalorder %s23, %s26
      %p35 = scmp.eq.s32.totalorder %s18, 1
      %p36 = por %p34, %p35
      %p37 = scmp.ne.s32.totalorder %s26, %s27
      %p38 = scmp.eq.s32.totalorder %s18, 0
      %p39 = por %p37, %p38
      %p40 = scmp.ne.s32.totalorder %s26, %s27
      %p41 = scmp.eq.s32.totalorder %s19, 1
      %p42 = por %p40, %p41
      %p44 = scmp.ne.s32.totalorder %s27, %s43
      %p45 = scmp.eq.s32.totalorder %s19, 0
      %p46 = por %p44, %p45
      %s48 = sadd.s32 %s47, 1
      %p51 = scmp.eq.s32.totalorder %s13, 1
      %p52 = scmp.ne.s32.totalorder %s47, %s49
      %p53 = scmp.eq.s32.totalorder %s13, 0
      %p54 = por %p52, %p53
      %p55 = scmp.ne.s32.totalorder %s47, %s49
      %p56 = scmp.eq.s32.totalorder %s18, 1
      %p57 = por %p55, %p56
      %p58 = scmp.ne.s32.totalorder %s49, %s50
      %p59 = scmp.eq.s32.totalorder %s18, 0
      %p60 = por %p58, %p59
      %p61 = scmp.ne.s32.totalorder %s49, %s50
      %p62 = scmp.eq.s32.totalorder %s19, 1
      %p63 = por %p61, %p62
      %p65 = scmp.ne.s32.totalorder %s50, %s64
      %p66 = scmp.eq.s32.totalorder %s19, 0
      %p67 = por %p65, %p66
      %s69 = sadd.s32 %s68, 1
      %p72 = scmp.eq.s32.totalorder %s13, 1
      %p73 = scmp.ne.s32.totalorder %s68, %s70
      %p74 = scmp.eq.s32.totalorder %s13, 0
      %p75 = por %p73, %p74
      %p76 = scmp.ne.s32.totalorder %s68, %s70
      %p77 = scmp.eq.s32.totalorder %s18, 1
      %p78 = por %p76, %p77
      %p79 = scmp.ne.s32.totalorder %s70, %s71
      %p80 = scmp.eq.s32.totalorder %s18, 0
      %p81 = por %p79, %p80
      %p82 = scmp.ne.s32.totalorder %s70, %s71
      %p83 = scmp.eq.s32.totalorder %s19, 1
      %p84 = por %p82, %p83
      %p86 = scmp.ne.s32.totalorder %s71, %s85
      %p87 = scmp.eq.s32.totalorder %s19, 0
      %p88 = por %p86, %p87
      %s90 = sadd.s32 %s89, 1
      %p93 = scmp.eq.s32.totalorder %s13, 1
      %p94 = scmp.ne.s32.totalorder %s89, %s91
      %p95 = scmp.eq.s32.totalorder %s13, 0
      %p96 = por %p94, %p95
      %p97 = scmp.ne.s32.totalorder %s89, %s91
      %p98 = scmp.eq.s32.totalorder %s18, 1
      %p99 = por %p97, %p98
      %p100 = scmp.ne.s32.totalorder %s91, %s92
      %p101 = scmp.eq.s32.totalorder %s18, 0
      %p102 = por %p100, %p101
      %p103 = scmp.ne.s32.totalorder %s91, %s92
      %p104 = scmp.eq.s32.totalorder %s19, 1
      %p105 = por %p103, %p104
      %p107 = scmp.ne.s32.totalorder %s92, %s106
      %p108 = scmp.eq.s32.totalorder %s19, 0
      %p109 = por %p107, %p108
      %s110 = ssub.s32 %s13, %s20
      %p111 = scmp.eq.s32.totalorder %s110, 0
      %s113 = sadd.s32 %s112, 1
      %s114 = scalar_select %p111, %s112, %s113
      %p117 = pneg %p111
      %p118 = scmp.eq.s32.totalorder %s13, 1
      %p119 = por %p117, %p118
      %p120 = scmp.ne.s32.totalorder %s112, %s115
      %p121 = scmp.eq.s32.totalorder %s13, 0
      %p122 = por %p120, %p121
      %p123 = scmp.ne.s32.totalorder %s112, %s115
      %p124 = scmp.eq.s32.totalorder %s18, 1
      %p125 = por %p123, %p124
      %p126 = scmp.ne.s32.totalorder %s115, %s116
      %p127 = scmp.eq.s32.totalorder %s18, 0
      %p128 = por %p126, %p127
      %p129 = scmp.ne.s32.totalorder %s115, %s116
      %p130 = scmp.eq.s32.totalorder %s19, 1
      %p131 = por %p129, %p130
      %p133 = scmp.ne.s32.totalorder %s116, %s132
      %p134 = scmp.eq.s32.totalorder %s19, 0
      %p135 = por %p133, %p134
      %p136 = scmp.le.s32.totalorder 1, %s13
      %p137 = scmp.lt.s32.totalorder %s13, 3
      %p138 = pnand %p136, %p137
      %p139 = pneg %p138
      // Predicated region
      $region9: #{tpu_custom_call.1} parent=5 // pred_check
        _
      $region10: #{tpu_custom_call.1} parent=5 // pred_check_branch
        %141 = sbr.rel (%p138) target = $region12
      $region11: #{tpu_custom_call.1} parent=5 // pred_region
        %s142 = ssub.s32 %s13, 1
        // Predicated region
        $region13: #{tpu_custom_call.1} parent=11 // pred_check
          %p143 = pneg %p60
        $region14: #{tpu_custom_call.1} parent=11 // pred_check_branch
          %145 = sbr.rel (%p143) target = $region16
        $region15: #{tpu_custom_call.1} parent=11 // pred_region
          _
        $region16: #{tpu_custom_call.1} parent=11 // pred_fallthru
          _
        // Predicated region
        $region17: #{tpu_custom_call.1} parent=11 // pred_check
          %p146 = pneg %p81
        $region18: #{tpu_custom_call.1} parent=11 // pred_check_branch
          %148 = sbr.rel (%p146) target = $region20
        $region19: #{tpu_custom_call.1} parent=11 // pred_region
          _
        $region20: #{tpu_custom_call.1} parent=11 // pred_fallthru
          _
        // Predicated region
        $region21: #{tpu_custom_call.1} parent=11 // pred_check
          %p149 = pneg %p102
        $region22: #{tpu_custom_call.1} parent=11 // pred_check_branch
          %151 = sbr.rel (%p149) target = $region24
        $region23: #{tpu_custom_call.1} parent=11 // pred_region
          _
        $region24: #{tpu_custom_call.1} parent=11 // pred_fallthru
          _
      $region12: #{tpu_custom_call.1} parent=5 // pred_fallthru
        _
      %p152 = scmp.lt.s32.totalorder %s13, 2
      // Predicated region
      $region25: #{tpu_custom_call.1} parent=5 // pred_check
        %p153 = pneg %p152
      $region26: #{tpu_custom_call.1} parent=5 // pred_check_branch
        %155 = sbr.rel (%p153) target = $region28
      $region27: #{tpu_custom_call.1} parent=5 // pred_region
        // Predicated region
        $region29: #{tpu_custom_call.1} parent=27 // pred_check
          %p156 = pneg %p33
        $region30: #{tpu_custom_call.1} parent=27 // pred_check_branch
          %158 = sbr.rel (%p156) target = $region32
        $region31: #{tpu_custom_call.1} parent=27 // pred_region
          %p159 = scmp.lt.s32.totalorder %s13, 1
          %s160 = scalar_select %p159, %s13, 1
          %s161 = smul.addr %s160, 72
          %s162 = smul.addr %s161, 4
          %s163 = scalar_lea.vmem %s0, %s162
        $region32: #{tpu_custom_call.1} parent=27 // pred_fallthru
          _
      $region28: #{tpu_custom_call.1} parent=5 // pred_fallthru
        _
      %p164 = scmp.le.s32.totalorder 1, %s13
      %p165 = scmp.lt.s32.totalorder %s13, 3
      %p166 = pnand %p164, %p165
      %p167 = pneg %p166
      // Predicated region
      $region33: #{tpu_custom_call.1} parent=5 // pred_check
        _
      $region34: #{tpu_custom_call.1} parent=5 // pred_check_branch
        %169 = sbr.rel (%p166) target = $region36
      $region35: #{tpu_custom_call.1} parent=5 // pred_region
        %s170 = ssub.s32 %s13, 1
        %p171 = scmp.lt.s32.totalorder %s18, 1
        %s172 = scalar_select %p171, %s18, 1
        %s173 = smul.addr %s172, 72
        %s174 = smul.addr %s173, 4
        %s175 = scalar_lea.vmem %s0, %s174
        %p176 = pneg %p39
        %p177 = pneg %p36
        %p178 = pneg %p60
        %p179 = pneg %p57
        %p180 = pneg %p81
        %p181 = pneg %p78
        %p182 = pneg %p102
        %p183 = pneg %p99
        %p184 = pneg %p128
        %p185 = pneg %p125
        %s186 = sand.u32 %s115, 1
        %s187 = scalar_lea.sflag [#allocation3], %s186
        %s188 = sand.u32 %s115, 1
        %s189 = smul.addr %s188, 32
        %s190 = scalar_lea.vmem [#allocation2], %s189
        %p191 = scmp.lt.s32.totalorder %s18, 1
        %s192 = scalar_select %p191, %s18, 1
        %s193 = smul.addr %s192, 72
        %s194 = smul.addr %s193, 4
        %s195 = scalar_lea.vmem %s0, %s194
        %s197 = scalar_lea.vmem %s195, 216
        %v198 = vld [vmem:[%s197] sm:$0xf]
        %v199 = vld [vmem:[%s197 + $0x8] sm:$0xf]
        %v200 = vld [vmem:[%s197 + $0x10] sm:$0xf]
        %v201 = vld [vmem:[%s197 + $0x18] sm:$0xf]
        %v202 = vld [vmem:[%s197 + $0x20] sm:$0xf]
        %v203 = vld [vmem:[%s197 + $0x28] sm:$0xf]
        %v204 = vld [vmem:[%s197 + $0x30] sm:$0xf]
        %v205 = vld [vmem:[%s197 + $0x38] sm:$0xf]
        %v206 = vld [vmem:[%s1] sm:$0xf]
        %v207 = vld [vmem:[%s1 + $0x4] sm:$0xf]
        %v208 = vld [vmem:[%s1 + $0x8] sm:$0xf]
        %v209 = vld [vmem:[%s1 + $0xc] sm:$0xf]
        %v218 = vunpack.c.l.b16 %v198
        %v219 = vunpack.c.l.b16 %v199
        %v220 = vunpack.c.l.b16 %v200
        %v221 = vunpack.c.l.b16 %v201
        %v222 = vunpack.c.l.b16 %v202
        %v223 = vunpack.c.l.b16 %v203
        %v224 = vunpack.c.l.b16 %v204
        %v225 = vunpack.c.l.b16 %v205
        %v226 = vpack.c.b16 %v219, %v218
        %v227 = vpack.c.b16 %v221, %v220
        %v228 = vpack.c.b16 %v223, %v222
        %v229 = vpack.c.b16 %v225, %v224
        %v234 = vunpack.c.l.b16 %v206
        %v235 = vunpack.c.l.b16 %v207
        %v236 = vunpack.c.l.b16 %v208
        %v237 = vunpack.c.l.b16 %v209
        %v238 = vpack.c.b16 %v235, %v234
        %v239 = vpack.c.b16 %v237, %v236
        %vm242 = vcmask 261120
        %v244 = vsel %vm242, %v226, 0
        %v247 = vsel %vm242, %v227, 0
        %v250 = vsel %vm242, %v228, 0
        %v253 = vsel %vm242, %v229, 0
        %255 = vmatprep.subr.bf16.mxu0 0
        %256 = vmatpush1.bf16.msra.mxu0 %v238
        %257 = vmatprep.subr.bf16.mxu0 0
        %258 = vmatpush1.bf16.msra.mxu0 %v239
        %259 = vmatprep.subr.bf16.mxu0 0
        %260 = vmatpush1.bf16.msra.mxu0 0
        %261 = vmatprep.subr.bf16.mxu0 0
        %262 = vmatpush1.bf16.msra.mxu0 0
        %263 = vmatprep.subr.bf16.mxu0 0
        %264 = vmatpush1.bf16.msra.mxu0 0
        %265 = vmatprep.subr.bf16.mxu0 0
        %266 = vmatpush1.bf16.msra.mxu0 0
        %267 = vmatprep.subr.bf16.mxu0 0
        %268 = vmatpush1.bf16.msra.mxu0 0
        %269 = vmatprep.subr.bf16.mxu0 0
        %270 = vmatpush1.bf16.msra.mxu0 0
        %271 = vmatprep.subr.bf16.mxu0 0
        %272 = vmatpush1.bf16.msra.mxu0 0
        %273 = vmatprep.subr.bf16.mxu0 0
        %274 = vmatpush1.bf16.msra.mxu0 0
        %275 = vmatprep.subr.bf16.mxu0 0
        %276 = vmatpush1.bf16.msra.mxu0 0
        %277 = vmatprep.subr.bf16.mxu0 0
        %278 = vmatpush1.bf16.msra.mxu0 0
        %279 = vmatprep.subr.bf16.mxu0 0
        %280 = vmatpush1.bf16.msra.mxu0 0
        %281 = vmatprep.subr.bf16.mxu0 0
        %282 = vmatpush1.bf16.msra.mxu0 0
        %283 = vmatprep.subr.bf16.mxu0 0
        %284 = vmatpush1.bf16.msra.mxu0 0
        %285 = vmatprep.subr.bf16.mxu0 0
        %286 = vmatpush1.bf16.msra.mxu0 0
        %287 = vmatprep.mubr.bf16.mxu0 0
        %288 = vmatmul.mubr.bf16.gmra.mrb[0].mxu0 %v244
        %v289 = vpop.f32.mrb[0].mxu0
        %v290 = vadd.f32 0.0, %v289
        %v291 = vpop.f32.mrb[0].mxu0
        %v292 = vpop.f32.mrb[0].mxu0
        %v293 = vadd.f32 0.0, %v292
        %v294 = vpop.f32.mrb[0].mxu0
        %295 = vmatprep.mubr.bf16.mxu0 0
        %296 = vmatmul.mubr.bf16.gmra.mrb[0].mxu0 %v247
        %v297 = vpop.f32.mrb[0].mxu0
        %v298 = vadd.f32 0.0, %v297
        %v299 = vpop.f32.mrb[0].mxu0
        %v300 = vpop.f32.mrb[0].mxu0
        %v301 = vadd.f32 0.0, %v300
        %v302 = vpop.f32.mrb[0].mxu0
        %303 = vmatprep.mubr.bf16.mxu0 0
        %304 = vmatmul.mubr.bf16.gmra.mrb[0].mxu0 %v250
        %v305 = vpop.f32.mrb[0].mxu0
        %v306 = vadd.f32 0.0, %v305
        %v307 = vpop.f32.mrb[0].mxu0
        %v308 = vpop.f32.mrb[0].mxu0
        %v309 = vadd.f32 0.0, %v308
        %v310 = vpop.f32.mrb[0].mxu0
        %311 = vmatprep.mubr.bf16.mxu0 0
        %312 = vmatmul.mubr.bf16.gmra.mrb[0].mxu0 %v253
        %v313 = vpop.f32.mrb[0].mxu0
        %v314 = vadd.f32 0.0, %v313
        %v315 = vpop.f32.mrb[0].mxu0
        %v316 = vpop.f32.mrb[0].mxu0
        %v317 = vadd.f32 0.0, %v316
        %v318 = vpop.f32.mrb[0].mxu0
        %319 = vdwg.mxu0
        %v320 = vld [vmem:[%s2] sm:$0x1]
        %v322 = vlaneseq
        %v323 = vshrl.u32 %v322, 7
        %v324 = vsub.s32 0, %v323
        %v325 = vrot.slane %v320, %v324
        %v327 = vmul.f32 %v290, %v325
        %v328 = vmul.f32 %v293, %v325
        %v329 = vmul.f32 %v298, %v325
        %v330 = vmul.f32 %v301, %v325
        %v331 = vmul.f32 %v306, %v325
        %v332 = vmul.f32 %v309, %v325
        %v333 = vmul.f32 %v314, %v325
        %v334 = vmul.f32 %v317, %v325
        %v335 = vld [vmem:[%s3] sm:$0x1]
        %v337 = vlaneseq
        %v338 = vshrl.u32 %v337, 7
        %v339 = vsub.s32 0, %v338
        %v340 = vrot.slane %v335, %v339
        %v342 = vadd.f32 %v327, %v340
        %v343 = vadd.f32 %v328, %v340
        %v344 = vadd.f32 %v329, %v340
        %v345 = vadd.f32 %v330, %v340
        %v346 = vadd.f32 %v331, %v340
        %v347 = vadd.f32 %v332, %v340
        %v348 = vadd.f32 %v333, %v340
        %v349 = vadd.f32 %v334, %v340
        %v350 = vpack.c.bf16 %v343, %v342
        %v351 = vpack.c.bf16 %v345, %v344
        %v352 = vpack.c.bf16 %v347, %v346
        %v353 = vpack.c.bf16 %v349, %v348
        %v358 = vunpack.c.l.b16 %v350
        %v359 = vunpack.c.h.b16 %v350
        %v360 = vunpack.c.l.b16 %v351
        %v361 = vunpack.c.h.b16 %v351
        %v362 = vunpack.c.l.b16 %v352
        %v363 = vunpack.c.h.b16 %v352
        %v364 = vunpack.c.l.b16 %v353
        %v365 = vunpack.c.h.b16 %v353
        %v366 = vpack.c.b16 %v358, %v358
        %v367 = vpack.c.b16 %v359, %v359
        %v368 = vpack.c.b16 %v360, %v360
        %v369 = vpack.c.b16 %v361, %v361
        %v370 = vpack.c.b16 %v362, %v362
        %v371 = vpack.c.b16 %v363, %v363
        %v372 = vpack.c.b16 %v364, %v364
        %v373 = vpack.c.b16 %v365, %v365
        %vm382 = vcmask 519168
        %383 = vst.msk [vmem:[%s190] sm:$0xf] %vm382, %v366
        %384 = vst.msk [vmem:[%s190 + $0x4] sm:$0xf] %vm382, %v367
        %385 = vst.msk [vmem:[%s190 + $0x8] sm:$0xf] %vm382, %v368
        %386 = vst.msk [vmem:[%s190 + $0xc] sm:$0xf] %vm382, %v369
        %387 = vst.msk [vmem:[%s190 + $0x10] sm:$0xf] %vm382, %v370
        %388 = vst.msk [vmem:[%s190 + $0x14] sm:$0xf] %vm382, %v371
        %389 = vst.msk [vmem:[%s190 + $0x18] sm:$0xf] %vm382, %v372
        %390 = vst.msk [vmem:[%s190 + $0x1c] sm:$0xf] %vm382, %v373
        %s391 = sand.u32 %s115, 1
        %s392 = scalar_lea.sflag [#allocation3], %s391
        %s393 = sand.u32 %s115, 1
        %s394 = smul.addr %s393, 32
        %s395 = scalar_lea.vmem [#allocation2], %s394
        // Predicated region
        $region37: #{tpu_custom_call.1} parent=35 // pred_check
          %p396 = pneg %p125
        $region38: #{tpu_custom_call.1} parent=35 // pred_check_branch
          %398 = sbr.rel (%p396) target = $region40
        $region39: #{tpu_custom_call.1} parent=35 // pred_region
          %s400 = ssub.s32 512, 512
          %401 = vsyncadd %s392, %s400
          %s402 = smul.addr %s18, 8
          %s403 = smul.addr %s402, 64
          %s404 = scalar_lea.hbm %s4, %s403
          %s405 = sshll.u32 %s395, 4
          %s406 = int_to_ptr.vmem [resolvable:$true] %s405
          %411 = dma.vmem_to_hbm [thread:$0]  %s406, 512, %s404, %s392, 64, 64, 4
        $region40: #{tpu_custom_call.1} parent=35 // pred_fallthru
          _
      $region36: #{tpu_custom_call.1} parent=5 // pred_fallthru
        _
      %p412 = scmp.le.s32.totalorder 2, %s13
      // Predicated region
      $region41: #{tpu_custom_call.1} parent=5 // pred_check
        %p413 = pneg %p412
      $region42: #{tpu_custom_call.1} parent=5 // pred_check_branch
        %415 = sbr.rel (%p413) target = $region44
      $region43: #{tpu_custom_call.1} parent=5 // pred_region
        %s416 = ssub.s32 %s13, 2
        // Predicated region
        $region45: #{tpu_custom_call.1} parent=43 // pred_check
          %p417 = pneg %p131
        $region46: #{tpu_custom_call.1} parent=43 // pred_check_branch
          %419 = sbr.rel (%p417) target = $region48
        $region47: #{tpu_custom_call.1} parent=43 // pred_region
          %s420 = sand.u32 %s116, 1
          %s421 = scalar_lea.sflag [#allocation3], %s420
          %s422 = sand.u32 %s116, 1
          %s423 = smul.addr %s422, 32
          %s424 = scalar_lea.vmem [#allocation2], %s423
          %425 = dma.done %s421, 512
        $region48: #{tpu_custom_call.1} parent=43 // pred_fallthru
          _
      $region44: #{tpu_custom_call.1} parent=5 // pred_fallthru
        _
    $region6: #{tpu_custom_call.1} parent=1 // loop_footer
      %s17 = sadd.s32 1, %s13
    $region7: #{tpu_custom_call.1} parent=1 // loop_footer_branch
      %12 = sbr.rel target = $region3
    $region8: #{tpu_custom_call.1} parent=1 // loop_exit
      _
    %426 = vsyncpa [#allocation3], 1
    %s427 = scalar_lea.sflag [#allocation3], 1
    %428 = vsyncpa %s427, 1

</llo_original>
